<compile_context>
chip_gen: v7x
topology: tpu7x:2x2x1
jax: 0.10.0
libtpu: 0.0.40
codegen_flags: <defaults>
</compile_context>

<pallas_src>
import jax
import jax.numpy as jnp
from jax.experimental import pallas as pl
from jax.experimental.pallas import tpu as pltpu


def _mlp_kernel(x_ref, w1_ref, b1_ref, w2_ref, b2_ref, o_ref):
    # Cast x to bf16 in-kernel, right at the MXU boundary (free VPU work,
    # hidden under the DMA/MXU; avoids a separate wrapper-side cast pass).
    x = x_ref[...].astype(jnp.bfloat16)
    # Layer 1: (TN, Cin)bf16 @ (Cin, Cmid)bf16 -> f32 accumulation on the MXU.
    h = jnp.dot(x, w1_ref[...], preferred_element_type=jnp.float32)
    h = h + b1_ref[...]                       # f32 bias add (VPU)
    # LeakyReLU (negative_slope = 0.01): one mul + one max.
    h = jnp.maximum(h, 0.01 * h)
    # Layer 2: cast the activation to bf16 only at the MXU boundary.
    out = jnp.dot(h.astype(w2_ref.dtype), w2_ref[...],
                  preferred_element_type=jnp.float32)
    out = out + b2_ref[...]                   # f32 bias add
    o_ref[...] = out.astype(o_ref.dtype)


def _round_up(x, m):
    return ((x + m - 1) // m) * m


def _choose_tile_n(n, requested):
    """Sublane-aligned row tile; halve until the grid keeps >= 4 steps so
    v7x's two TensorCores each get >= 2 blocks to double-buffer."""
    tile = max(128, _round_up(requested, 128))
    while tile > 128 and pl.cdiv(n, tile) < 4:
        tile //= 2
    return tile


def prepare_mlp_params(w1, b1, w2, b2):
    """One-time parameter prep (hoisted out of the per-call path):
    bf16 MXU weights, f32 row-vector biases."""
    return (w1.astype(jnp.bfloat16),
            b1.astype(jnp.float32).reshape(1, -1),
            w2.astype(jnp.bfloat16),
            b2.astype(jnp.float32).reshape(1, -1))


def mlp_forward(x, w1b, b1_2d, w2b, b2_2d, *, tile_n=512):
    """x: [N, Cin] (f32); w1b: [Cin, Cmid] bf16; b1_2d: [1, Cmid] f32;
    w2b: [Cmid, Cout] bf16; b2_2d: [1, Cout] f32.  Returns [N, Cout] in x.dtype."""
    n, c_in = x.shape
    c_mid = w1b.shape[1]
    c_out = w2b.shape[1]
    out_dtype = x.dtype

    tile_n = _choose_tile_n(n, tile_n)
    grid = (pl.cdiv(n, tile_n),)  # boundary block handles the tail: OOB output
    # rows are not written, OOB input rows are garbage but row-independent.

    out = pl.pallas_call(
        _mlp_kernel,
        out_shape=jax.ShapeDtypeStruct((n, c_out), out_dtype),
        grid_spec=pltpu.PrefetchScalarGridSpec(
            num_scalar_prefetch=0,
            grid=grid,
            in_specs=[
                pl.BlockSpec((tile_n, c_in), lambda i: (i, 0)),   # x tile (streamed)
                pl.BlockSpec((c_in, c_mid), lambda i: (0, 0)),    # W1 (resident)
                pl.BlockSpec((1, c_mid), lambda i: (0, 0)),       # b1 (resident)
                pl.BlockSpec((c_mid, c_out), lambda i: (0, 0)),   # W2 (resident)
                pl.BlockSpec((1, c_out), lambda i: (0, 0)),       # b2 (resident)
            ],
            # Full last dim (c_out) is legal even when < 128; avoids 4x padded
            # writeback and a post-kernel slice.
            out_specs=pl.BlockSpec((tile_n, c_out), lambda i: (i, 0)),
        ),
        compiler_params=pltpu.CompilerParams(
            dimension_semantics=("parallel",),  # lets v7x shard steps over 2 TCs
        ),
    )(x, w1b, b1_2d, w2b, b2_2d)

    return out


def _init_linear(key, fan_in, fan_out, dtype=jnp.float32):
    """Deterministic init matching PyTorch nn.Linear's U(-1/sqrt(fan_in), +...)."""
    kw, kb = jax.random.split(key)
    bound = 1.0 / jnp.sqrt(jnp.asarray(fan_in, dtype))
    # Stored as [fan_in, fan_out] (transpose of PyTorch's [out, in]).
    w = jax.random.uniform(kw, (fan_in, fan_out), dtype, -bound, bound)
    b = jax.random.uniform(kb, (fan_out,), dtype, -bound, bound)
    return w, b


if __name__ == "__main__":
    key = jax.random.PRNGKey(0)
    k_x, k_l1, k_l2 = jax.random.split(key, 3)

    # Shapes consistent with MLP(in_channels=16, out_channels=32, mid=128).
    # N is deliberately NOT a multiple of the tile so the boundary-block path
    # (grid = cdiv, no padding) is exercised: tile_n -> 256, 4 grid steps,
    # last step covers only 232 valid rows.
    N, C_IN, C_MID, C_OUT = 1000, 16, 128, 32

    x = jax.random.normal(k_x, (N, C_IN), jnp.float32)
    w1, b1 = _init_linear(k_l1, C_IN, C_MID)
    w2, b2 = _init_linear(k_l2, C_MID, C_OUT)

    params = prepare_mlp_params(w1, b1, w2, b2)   # one-time prep
    out = mlp_forward(x, *params)
    out = jax.block_until_ready(out)
    assert out.shape == (N, C_OUT)
    assert out.dtype == x.dtype

    # Reference 1: same bf16-in / f32-accumulate recipe in plain JAX (tight).
    xb, w1b, w2b = (t.astype(jnp.bfloat16) for t in (x, w1, w2))
    h_ref = jnp.dot(xb, w1b, preferred_element_type=jnp.float32) + b1
    h_ref = jnp.maximum(h_ref, 0.01 * h_ref)
    ref_bf16 = jnp.dot(h_ref.astype(jnp.bfloat16), w2b,
                       preferred_element_type=jnp.float32) + b2
    assert jnp.allclose(out, ref_bf16.astype(x.dtype), atol=1e-2, rtol=1e-2)

    # Reference 2: pure f32 forward (loose — quantization error of bf16 inputs).
    h32 = x @ w1 + b1
    h32 = jnp.where(h32 > 0, h32, 0.01 * h32)
    ref_f32 = h32 @ w2 + b2
    assert jnp.allclose(out, ref_f32, atol=5e-2, rtol=5e-2)

    print("KERNEL_OK")
</pallas_src>

<mosaic_0001>
module attributes {stable_mosaic.version = 11 : i64} {
  func.func @_mlp_kernel(%arg0: i32, %arg1: memref<256x16xf32, #tpu.memory_space<vmem>>, %arg2: memref<16x128xbf16, #tpu.memory_space<vmem>>, %arg3: memref<1x128xf32, #tpu.memory_space<vmem>>, %arg4: memref<128x32xbf16, #tpu.memory_space<vmem>>, %arg5: memref<1x32xf32, #tpu.memory_space<vmem>>, %arg6: memref<256x32xf32, #tpu.memory_space<vmem>>) attributes {dimension_semantics = [#tpu.dimension_semantics<parallel>], iteration_bounds = array<i64: 4>, scalar_prefetch = 0 : i64, scratch_operands = 0 : i64, tpu.core_type = #tpu.core_type<tc>, window_params = [{transform_indices = @transform_0, window_bounds = array<i64: 256, 16>}, {pipeline_mode = #tpu.pipeline_mode<synchronous>, transform_indices = @transform_1, window_bounds = array<i64: 16, 128>}, {pipeline_mode = #tpu.pipeline_mode<synchronous>, transform_indices = @transform_2, window_bounds = array<i64: 1, 128>}, {pipeline_mode = #tpu.pipeline_mode<synchronous>, transform_indices = @transform_3, window_bounds = array<i64: 128, 32>}, {pipeline_mode = #tpu.pipeline_mode<synchronous>, transform_indices = @transform_4, window_bounds = array<i64: 1, 32>}, {transform_indices = @transform_5, window_bounds = array<i64: 256, 32>}]} {
    %c0 = arith.constant 0 : index
    %c0_0 = arith.constant 0 : index
    %0 = vector.load %arg1[%c0, %c0_0] : memref<256x16xf32, #tpu.memory_space<vmem>>, vector<256x16xf32>
    %1 = arith.truncf %0 : vector<256x16xf32> to vector<256x16xbf16>
    %c0_1 = arith.constant 0 : index
    %c0_2 = arith.constant 0 : index
    %2 = vector.load %arg2[%c0_1, %c0_2] : memref<16x128xbf16, #tpu.memory_space<vmem>>, vector<16x128xbf16>
    %cst = arith.constant dense<0.000000e+00> : vector<256x128xf32>
    %3 = tpu.matmul %1, %2, %cst {dimension_numbers = #tpu.dot_dimension_numbers<[1], [0], [0], [1], [0, 0, 1, 1], [], []>} : vector<256x16xbf16>, vector<16x128xbf16>, vector<256x128xf32> -> vector<256x128xf32>
    %c0_3 = arith.constant 0 : index
    %c0_4 = arith.constant 0 : index
    %4 = vector.load %arg3[%c0_3, %c0_4] : memref<1x128xf32, #tpu.memory_space<vmem>>, vector<1x128xf32>
    %5 = vector.broadcast %4 : vector<1x128xf32> to vector<256x128xf32>
    %6 = arith.addf %3, %5 : vector<256x128xf32>
    %cst_5 = arith.constant 0.00999999977 : f32
    %7 = vector.broadcast %cst_5 : f32 to vector<256x128xf32>
    %8 = arith.mulf %7, %6 : vector<256x128xf32>
    %9 = arith.maximumf %6, %8 : vector<256x128xf32>
    %10 = arith.truncf %9 : vector<256x128xf32> to vector<256x128xbf16>
    %c0_6 = arith.constant 0 : index
    %c0_7 = arith.constant 0 : index
    %11 = vector.load %arg4[%c0_6, %c0_7] : memref<128x32xbf16, #tpu.memory_space<vmem>>, vector<128x32xbf16>
    %cst_8 = arith.constant dense<0.000000e+00> : vector<256x32xf32>
    %12 = tpu.matmul %10, %11, %cst_8 {dimension_numbers = #tpu.dot_dimension_numbers<[1], [0], [0], [1], [0, 0, 1, 1], [], []>} : vector<256x128xbf16>, vector<128x32xbf16>, vector<256x32xf32> -> vector<256x32xf32>
    %c0_9 = arith.constant 0 : index
    %c0_10 = arith.constant 0 : index
    %13 = vector.load %arg5[%c0_9, %c0_10] : memref<1x32xf32, #tpu.memory_space<vmem>>, vector<1x32xf32>
    %14 = vector.broadcast %13 : vector<1x32xf32> to vector<256x32xf32>
    %15 = arith.addf %12, %14 : vector<256x32xf32>
    %c0_11 = arith.constant 0 : index
    %c0_12 = arith.constant 0 : index
    %16 = vector.load %arg6[%c0_11, %c0_12] : memref<256x32xf32, #tpu.memory_space<vmem>>, vector<256x32xf32>
    tpu.vector_store %arg6[%c0_11, %c0_12], %15 {strides = array<i32>} : memref<256x32xf32, #tpu.memory_space<vmem>>, vector<256x32xf32>,
    return
  }
  func.func @transform_0(%arg0: i32) -> (i32, i32) {
    %c0_i32 = arith.constant 0 : i32
    %c0_i32_0 = arith.constant 0 : i32
    return %arg0, %c0_i32 : i32, i32
  }
  func.func @transform_1(%arg0: i32) -> (i32, i32) {
    %c0_i32 = arith.constant 0 : i32
    %c0_i32_0 = arith.constant 0 : i32
    %c0_i32_1 = arith.constant 0 : i32
    return %c0_i32, %c0_i32_0 : i32, i32
  }
  func.func @transform_2(%arg0: i32) -> (i32, i32) {
    %c0_i32 = arith.constant 0 : i32
    %c0_i32_0 = arith.constant 0 : i32
    %c0_i32_1 = arith.constant 0 : i32
    return %c0_i32, %c0_i32_0 : i32, i32
  }
  func.func @transform_3(%arg0: i32) -> (i32, i32) {
    %c0_i32 = arith.constant 0 : i32
    %c0_i32_0 = arith.constant 0 : i32
    %c0_i32_1 = arith.constant 0 : i32
    return %c0_i32, %c0_i32_0 : i32, i32
  }
  func.func @transform_4(%arg0: i32) -> (i32, i32) {
    %c0_i32 = arith.constant 0 : i32
    %c0_i32_0 = arith.constant 0 : i32
    %c0_i32_1 = arith.constant 0 : i32
    return %c0_i32, %c0_i32_0 : i32, i32
  }
  func.func @transform_5(%arg0: i32) -> (i32, i32) {
    %c0_i32 = arith.constant 0 : i32
    %c0_i32_0 = arith.constant 0 : i32
    return %arg0, %c0_i32 : i32, i32
  }
}

</mosaic_0001>

<llo_original>
// kernel: tpu_custom_call.1
$region0: #{tpu_custom_call.1}
  #allocation0 [shape = 'u32[]', space=smem, size = 0x4, offset = 0x4, fixed_abs, tag = 'smem constant byte address 0x4 - core index']
  #allocation1 [shape = 'u32[144,128]{1,0:T(1,128)}', space=vmem, size = 0x12000, scoped, tag = 'internal scratch']
  %s0 = inlined_call_operand.vmem [shape: f32[1000,16], index: 0, kind: input, shape index: {}]
  %s1 = inlined_call_operand.vmem [shape: bf16[16,128], index: 1, kind: input, shape index: {}]
  %s2 = inlined_call_operand.vmem [shape: f32[1,128], index: 2, kind: input, shape index: {}]
  %s3 = inlined_call_operand.vmem [shape: bf16[128,32], index: 3, kind: input, shape index: {}]
  %s4 = inlined_call_operand.vmem [shape: f32[1,32], index: 4, kind: input, shape index: {}]
  %s5 = inlined_call_operand.vmem [shape: f32[1000,32], index: 5, kind: output, shape index: {}]
  %s6 = sld [smem:[#allocation0]]
  $region101: #{tpu_custom_call.1} parent=0
    _
  %s8 = ssub.s32 1, %s6
  %s9 = scalar_select 0, %s8, %s6
  $region1: #{tpu_custom_call.1} parent=0
    #allocation2 [shape = 'u8[262144]{0}', space=vmem, size = 0x40000, scoped, tag = 'output window, operand 0']
    loop: start=0, step=1, limit=6
    $region2: #{tpu_custom_call.1} parent=1 // loop_pre_header
      _
    $region3: #{tpu_custom_call.1} parent=1 // loop_header
      %s11 = sphi 0, %s15
      %p12 = scmp.ge.s32.totalorder %s11, 6
      %s21 = sphi 0, %s23
      %s24 = sphi 0, %s21
      %s25 = sphi 0, %s24
      %s41 = sphi 0, %s25
      %s45 = sphi 0, %s45
      %s47 = sphi 0, %s45
      %s48 = sphi 0, %s47
      %s62 = sphi 0, %s48
      %s66 = sphi 0, %s66
      %s68 = sphi 0, %s66
      %s69 = sphi 0, %s68
      %s83 = sphi 0, %s69
      %s87 = sphi 0, %s87
      %s89 = sphi 0, %s87
      %s90 = sphi 0, %s89
      %s104 = sphi 0, %s90
      %s108 = sphi 0, %s108
      %s110 = sphi 0, %s108
      %s111 = sphi 0, %s110
      %s125 = sphi 0, %s111
      %s131 = sphi 0, %s133
      %s134 = sphi 0, %s131
      %s135 = sphi 0, %s134
      %s151 = sphi 0, %s135
    $region4: #{tpu_custom_call.1} parent=1 // loop_header_branch
      %14 = sbr.rel (%p12) target = $region8
    $region5: #{tpu_custom_call.1} parent=1 // loop_body
      %s16 = ssub.s32 %s11, 1
      %s17 = ssub.s32 %s11, 2
      %s18 = sadd.s32 %s11, 1
      %s19 = ssub.s32 %s11, %s18
      %p20 = scmp.eq.s32.totalorder %s19, 0
      %s22 = sadd.s32 %s21, 1
      %s23 = scalar_select %p20, %s21, %s22
      %p26 = pneg %p20
      %p27 = scmp.eq.s32.totalorder %s11, 3
      %p28 = por %p26, %p27
      %p29 = scmp.ne.s32.totalorder %s21, %s24
      %p30 = scmp.eq.s32.totalorder %s11, 0
      %p31 = por %p29, %p30
      %p32 = scmp.ne.s32.totalorder %s21, %s24
      %p33 = scmp.eq.s32.totalorder %s16, 3
      %p34 = por %p32, %p33
      %p35 = scmp.ne.s32.totalorder %s24, %s25
      %p36 = scmp.eq.s32.totalorder %s16, 0
      %p37 = por %p35, %p36
      %p38 = scmp.ne.s32.totalorder %s24, %s25
      %p39 = scmp.eq.s32.totalorder %s17, 3
      %p40 = por %p38, %p39
      %p42 = scmp.ne.s32.totalorder %s25, %s41
      %p43 = scmp.eq.s32.totalorder %s17, 0
      %p44 = por %p42, %p43
      %s46 = sadd.s32 %s45, 1
      %p49 = scmp.eq.s32.totalorder %s11, 3
      %p50 = scmp.ne.s32.totalorder %s45, %s47
      %p51 = scmp.eq.s32.totalorder %s11, 0
      %p52 = por %p50, %p51
      %p53 = scmp.ne.s32.totalorder %s45, %s47
      %p54 = scmp.eq.s32.totalorder %s16, 3
      %p55 = por %p53, %p54
      %p56 = scmp.ne.s32.totalorder %s47, %s48
      %p57 = scmp.eq.s32.totalorder %s16, 0
      %p58 = por %p56, %p57
      %p59 = scmp.ne.s32.totalorder %s47, %s48
      %p60 = scmp.eq.s32.totalorder %s17, 3
      %p61 = por %p59, %p60
      %p63 = scmp.ne.s32.totalorder %s48, %s62
      %p64 = scmp.eq.s32.totalorder %s17, 0
      %p65 = por %p63, %p64
      %s67 = sadd.s32 %s66, 1
      %p70 = scmp.eq.s32.totalorder %s11, 3
      %p71 = scmp.ne.s32.totalorder %s66, %s68
      %p72 = scmp.eq.s32.totalorder %s11, 0
      %p73 = por %p71, %p72
      %p74 = scmp.ne.s32.totalorder %s66, %s68
      %p75 = scmp.eq.s32.totalorder %s16, 3
      %p76 = por %p74, %p75
      %p77 = scmp.ne.s32.totalorder %s68, %s69
      %p78 = scmp.eq.s32.totalorder %s16, 0
      %p79 = por %p77, %p78
      %p80 = scmp.ne.s32.totalorder %s68, %s69
      %p81 = scmp.eq.s32.totalorder %s17, 3
      %p82 = por %p80, %p81
      %p84 = scmp.ne.s32.totalorder %s69, %s83
      %p85 = scmp.eq.s32.totalorder %s17, 0
      %p86 = por %p84, %p85
      %s88 = sadd.s32 %s87, 1
      %p91 = scmp.eq.s32.totalorder %s11, 3
      %p92 = scmp.ne.s32.totalorder %s87, %s89
      %p93 = scmp.eq.s32.totalorder %s11, 0
      %p94 = por %p92, %p93
      %p95 = scmp.ne.s32.totalorder %s87, %s89
      %p96 = scmp.eq.s32.totalorder %s16, 3
      %p97 = por %p95, %p96
      %p98 = scmp.ne.s32.totalorder %s89, %s90
      %p99 = scmp.eq.s32.totalorder %s16, 0
      %p100 = por %p98, %p99
      %p101 = scmp.ne.s32.totalorder %s89, %s90
      %p102 = scmp.eq.s32.totalorder %s17, 3
      %p103 = por %p101, %p102
      %p105 = scmp.ne.s32.totalorder %s90, %s104
      %p106 = scmp.eq.s32.totalorder %s17, 0
      %p107 = por %p105, %p106
      %s109 = sadd.s32 %s108, 1
      %p112 = scmp.eq.s32.totalorder %s11, 3
      %p113 = scmp.ne.s32.totalorder %s108, %s110
      %p114 = scmp.eq.s32.totalorder %s11, 0
      %p115 = por %p113, %p114
      %p116 = scmp.ne.s32.totalorder %s108, %s110
      %p117 = scmp.eq.s32.totalorder %s16, 3
      %p118 = por %p116, %p117
      %p119 = scmp.ne.s32.totalorder %s110, %s111
      %p120 = scmp.eq.s32.totalorder %s16, 0
      %p121 = por %p119, %p120
      %p122 = scmp.ne.s32.totalorder %s110, %s111
      %p123 = scmp.eq.s32.totalorder %s17, 3
      %p124 = por %p122, %p123
      %p126 = scmp.ne.s32.totalorder %s111, %s125
      %p127 = scmp.eq.s32.totalorder %s17, 0
      %p128 = por %p126, %p127
      %s129 = ssub.s32 %s11, %s18
      %p130 = scmp.eq.s32.totalorder %s129, 0
      %s132 = sadd.s32 %s131, 1
      %s133 = scalar_select %p130, %s131, %s132
      %p136 = pneg %p130
      %p137 = scmp.eq.s32.totalorder %s11, 3
      %p138 = por %p136, %p137
      %p139 = scmp.ne.s32.totalorder %s131, %s134
      %p140 = scmp.eq.s32.totalorder %s11, 0
      %p141 = por %p139, %p140
      %p142 = scmp.ne.s32.totalorder %s131, %s134
      %p143 = scmp.eq.s32.totalorder %s16, 3
      %p144 = por %p142, %p143
      %p145 = scmp.ne.s32.totalorder %s134, %s135
      %p146 = scmp.eq.s32.totalorder %s16, 0
      %p147 = por %p145, %p146
      %p148 = scmp.ne.s32.totalorder %s134, %s135
      %p149 = scmp.eq.s32.totalorder %s17, 3
      %p150 = por %p148, %p149
      %p152 = scmp.ne.s32.totalorder %s135, %s151
      %p153 = scmp.eq.s32.totalorder %s17, 0
      %p154 = por %p152, %p153
      %p155 = scmp.le.s32.totalorder 1, %s11
      %p156 = scmp.lt.s32.totalorder %s11, 5
      %p157 = pnand %p155, %p156
      %p158 = pneg %p157
      // Predicated region
      $region9: #{tpu_custom_call.1} parent=5 // pred_check
        _
      $region10: #{tpu_custom_call.1} parent=5 // pred_check_branch
        %160 = sbr.rel (%p157) target = $region12
      $region11: #{tpu_custom_call.1} parent=5 // pred_region
        %s161 = ssub.s32 %s11, 1
        // Predicated region
        $region13: #{tpu_custom_call.1} parent=11 // pred_check
          %p162 = pneg %p58
        $region14: #{tpu_custom_call.1} parent=11 // pred_check_branch
          %164 = sbr.rel (%p162) target = $region16
        $region15: #{tpu_custom_call.1} parent=11 // pred_region
          _
        $region16: #{tpu_custom_call.1} parent=11 // pred_fallthru
          _
        // Predicated region
        $region17: #{tpu_custom_call.1} parent=11 // pred_check
          %p165 = pneg %p79
        $region18: #{tpu_custom_call.1} parent=11 // pred_check_branch
          %167 = sbr.rel (%p165) target = $region20
        $region19: #{tpu_custom_call.1} parent=11 // pred_region
          _
        $region20: #{tpu_custom_call.1} parent=11 // pred_fallthru
          _
        // Predicated region
        $region21: #{tpu_custom_call.1} parent=11 // pred_check
          %p168 = pneg %p100
        $region22: #{tpu_custom_call.1} parent=11 // pred_check_branch
          %170 = sbr.rel (%p168) target = $region24
        $region23: #{tpu_custom_call.1} parent=11 // pred_region
          _
        $region24: #{tpu_custom_call.1} parent=11 // pred_fallthru
          _
        // Predicated region
        $region25: #{tpu_custom_call.1} parent=11 // pred_check
          %p171 = pneg %p121
        $region26: #{tpu_custom_call.1} parent=11 // pred_check_branch
          %173 = sbr.rel (%p171) target = $region28
        $region27: #{tpu_custom_call.1} parent=11 // pred_region
          _
        $region28: #{tpu_custom_call.1} parent=11 // pred_fallthru
          _
      $region12: #{tpu_custom_call.1} parent=5 // pred_fallthru
        _
      %p174 = scmp.lt.s32.totalorder %s11, 4
      // Predicated region
      $region29: #{tpu_custom_call.1} parent=5 // pred_check
        %p175 = pneg %p174
      $region30: #{tpu_custom_call.1} parent=5 // pred_check_branch
        %177 = sbr.rel (%p175) target = $region32
      $region31: #{tpu_custom_call.1} parent=5 // pred_region
        // Predicated region
        $region33: #{tpu_custom_call.1} parent=31 // pred_check
          %p178 = pneg %p31
        $region34: #{tpu_custom_call.1} parent=31 // pred_check_branch
          %180 = sbr.rel (%p178) target = $region36
        $region35: #{tpu_custom_call.1} parent=31 // pred_region
          %s181 = smul.u32 32, %s11
          %s182 = ssub.s32 125, %s181
          %p183 = scmp.lt.s32.totalorder %s182, 32
          %s184 = scalar_select %p183, %s182, 32
          %s185 = smul.u32 128, %s184
          %p186 = scmp.lt.s32.totalorder %s181, 124
          %s187 = scalar_select %p186, %s181, 124
          %s188 = smul.addr %s187, 8
          %s189 = scalar_lea.vmem %s0, %s188
          %s190 = smul.u32 32, %s11
          %s191 = ssub.s32 125, %s190
          %p192 = scmp.lt.s32.totalorder %s191, 32
          %s193 = scalar_select %p192, %s191, 32
          %s194 = smul.u32 128, %s193
        $region36: #{tpu_custom_call.1} parent=31 // pred_fallthru
          _
      $region32: #{tpu_custom_call.1} parent=5 // pred_fallthru
        _
      %p195 = scmp.le.s32.totalorder 1, %s11
      %p196 = scmp.lt.s32.totalorder %s11, 5
      %p197 = pnand %p195, %p196
      %p198 = pneg %p197
      // Predicated region
      $region37: #{tpu_custom_call.1} parent=5 // pred_check
        _
      $region38: #{tpu_custom_call.1} parent=5 // pred_check_branch
        %200 = sbr.rel (%p197) target = $region40
      $region39: #{tpu_custom_call.1} parent=5 // pred_region
        %s201 = ssub.s32 %s11, 1
        %s202 = smul.u32 32, %s16
        %s203 = ssub.s32 125, %s202
        %p204 = scmp.lt.s32.totalorder %s203, 32
        %s205 = scalar_select %p204, %s203, 32
        %s206 = smul.u32 128, %s205
        %p207 = scmp.lt.s32.totalorder %s202, 124
        %s208 = scalar_select %p207, %s202, 124
        %s209 = smul.addr %s208, 8
        %s210 = scalar_lea.vmem %s0, %s209
        %p211 = pneg %p37
        %p212 = pneg %p34
        %p213 = pneg %p58
        %p214 = pneg %p55
        %p215 = pneg %p79
        %p216 = pneg %p76
        %p217 = pneg %p100
        %p218 = pneg %p97
        %p219 = pneg %p121
        %p220 = pneg %p118
        %p221 = pneg %p147
        %p222 = pneg %p144
        %s223 = sand.u32 %s134, 1
        %s224 = sand.u32 %s134, 1
        %s225 = smul.addr %s224, 256
        %s226 = scalar_lea.vmem [#allocation2], %s225
        %s227 = smul.u32 32, %s16
        %s228 = ssub.s32 125, %s227
        %p229 = scmp.lt.s32.totalorder %s228, 32
        %s230 = scalar_select %p229, %s228, 32
        %s231 = smul.u32 128, %s230
        %p232 = scmp.lt.s32.totalorder %s227, 124
        %s233 = scalar_select %p232, %s227, 124
        %s234 = smul.addr %s233, 8
        %s235 = scalar_lea.vmem %s0, %s234
        %s236 = smul.u32 32, %s16
        %s237 = ssub.s32 125, %s236
        %p238 = scmp.lt.s32.totalorder %s237, 32
        %s239 = scalar_select %p238, %s237, 32
        %s240 = smul.u32 128, %s239
        %s241 = smul.u32 32, %s16
        %s242 = ssub.s32 125, %s241
        %p243 = scmp.lt.s32.totalorder %s242, 32
        %s244 = scalar_select %p243, %s242, 32
        %s245 = smul.u32 128, %s244
        %v247 = vld [vmem:[%s235] sm:$0xff]
        %v248 = vld [vmem:[%s235 + $0x8] sm:$0xff]
        %v249 = vld [vmem:[%s235 + $0x10] sm:$0xff]
        %v250 = vld [vmem:[%s235 + $0x18] sm:$0xff]
        %v251 = vld [vmem:[%s235 + $0x20] sm:$0xff]
        %v252 = vld [vmem:[%s235 + $0x28] sm:$0xff]
        %v253 = vld [vmem:[%s235 + $0x30] sm:$0xff]
        %v254 = vld [vmem:[%s235 + $0x38] sm:$0xff]
        %v255 = vld [vmem:[%s235 + $0x40] sm:$0xff]
        %v256 = vld [vmem:[%s235 + $0x48] sm:$0xff]
        %v257 = vld [vmem:[%s235 + $0x50] sm:$0xff]
        %v258 = vld [vmem:[%s235 + $0x58] sm:$0xff]
        %v259 = vld [vmem:[%s235 + $0x60] sm:$0xff]
        %v260 = vld [vmem:[%s235 + $0x68] sm:$0xff]
        %v261 = vld [vmem:[%s235 + $0x70] sm:$0xff]
        %v262 = vld [vmem:[%s235 + $0x78] sm:$0xff]
        %v263 = vld [vmem:[%s235 + $0x80] sm:$0xff]
        %v264 = vld [vmem:[%s235 + $0x88] sm:$0xff]
        %v265 = vld [vmem:[%s235 + $0x90] sm:$0xff]
        %v266 = vld [vmem:[%s235 + $0x98] sm:$0xff]
        %v267 = vld [vmem:[%s235 + $0xa0] sm:$0xff]
        %v268 = vld [vmem:[%s235 + $0xa8] sm:$0xff]
        %v269 = vld [vmem:[%s235 + $0xb0] sm:$0xff]
        %v270 = vld [vmem:[%s235 + $0xb8] sm:$0xff]
        %v271 = vld [vmem:[%s235 + $0xc0] sm:$0xff]
        %v272 = vld [vmem:[%s235 + $0xc8] sm:$0xff]
        %v273 = vld [vmem:[%s235 + $0xd0] sm:$0xff]
        %v274 = vld [vmem:[%s235 + $0xd8] sm:$0xff]
        %v275 = vld [vmem:[%s235 + $0xe0] sm:$0xff]
        %v276 = vld [vmem:[%s235 + $0xe8] sm:$0xff]
        %v277 = vld [vmem:[%s235 + $0xf0] sm:$0xff]
        %v278 = vld [vmem:[%s235 + $0xf8] sm:$0xff]
        %v279 = vpack.c.bf16 %v248, %v247
        %v280 = vpack.c.bf16 %v250, %v249
        %v281 = vpack.c.bf16 %v252, %v251
        %v282 = vpack.c.bf16 %v254, %v253
        %v283 = vpack.c.bf16 %v256, %v255
        %v284 = vpack.c.bf16 %v258, %v257
        %v285 = vpack.c.bf16 %v260, %v259
        %v286 = vpack.c.bf16 %v262, %v261
        %v287 = vpack.c.bf16 %v264, %v263
        %v288 = vpack.c.bf16 %v266, %v265
        %v289 = vpack.c.bf16 %v268, %v267
        %v290 = vpack.c.bf16 %v270, %v269
        %v291 = vpack.c.bf16 %v272, %v271
        %v292 = vpack.c.bf16 %v274, %v273
        %v293 = vpack.c.bf16 %v276, %v275
        %v294 = vpack.c.bf16 %v278, %v277
        %v295 = vld [vmem:[%s1] sm:$0xf]
        %v296 = vld [vmem:[%s1 + $0x4] sm:$0xf]
        %v297 = vld [vmem:[%s2] sm:$0x1]
        %v299 = vlaneseq
        %v300 = vshrl.u32 %v299, 7
        %v301 = vsub.s32 0, %v300
        %v302 = vrot.slane %v297, %v301
        %v306 = vunpack.c.l.b16 %v295
        %v307 = vunpack.c.l.b16 %v296
        %v308 = vpack.c.b16 %v307, %v306
        %vm310 = vcmask 130048
        %v312 = vsel %vm310, %v279, 0
        %v315 = vsel %vm310, %v280, 0
        %v318 = vsel %vm310, %v281, 0
        %v321 = vsel %vm310, %v282, 0
        %v324 = vsel %vm310, %v283, 0
        %v327 = vsel %vm310, %v284, 0
        %v330 = vsel %vm310, %v285, 0
        %v333 = vsel %vm310, %v286, 0
        %v336 = vsel %vm310, %v287, 0
        %v339 = vsel %vm310, %v288, 0
        %v342 = vsel %vm310, %v289, 0
        %v345 = vsel %vm310, %v290, 0
        %v348 = vsel %vm310, %v291, 0
        %v351 = vsel %vm310, %v292, 0
        %v354 = vsel %vm310, %v293, 0
        %v357 = vsel %vm310, %v294, 0
        %359 = vmatprep.subr.bf16.mxu0 0
        %360 = vmatpush1.bf16.msra.mxu0 %v308
        %361 = vmatprep.subr.bf16.mxu0 0
        %362 = vmatpush1.bf16.msra.mxu0 0
        %363 = vmatprep.subr.bf16.mxu0 0
        %364 = vmatpush1.bf16.msra.mxu0 0
        %365 = vmatprep.subr.bf16.mxu0 0
        %366 = vmatpush1.bf16.msra.mxu0 0
        %367 = vmatprep.subr.bf16.mxu0 0
        %368 = vmatpush1.bf16.msra.mxu0 0
        %369 = vmatprep.subr.bf16.mxu0 0
        %370 = vmatpush1.bf16.msra.mxu0 0
        %371 = vmatprep.subr.bf16.mxu0 0
        %372 = vmatpush1.bf16.msra.mxu0 0
        %373 = vmatprep.subr.bf16.mxu0 0
        %374 = vmatpush1.bf16.msra.mxu0 0
        %375 = vmatprep.subr.bf16.mxu0 0
        %376 = vmatpush1.bf16.msra.mxu0 0
        %377 = vmatprep.subr.bf16.mxu0 0
        %378 = vmatpush1.bf16.msra.mxu0 0
        %379 = vmatprep.subr.bf16.mxu0 0
        %380 = vmatpush1.bf16.msra.mxu0 0
        %381 = vmatprep.subr.bf16.mxu0 0
        %382 = vmatpush1.bf16.msra.mxu0 0
        %383 = vmatprep.subr.bf16.mxu0 0
        %384 = vmatpush1.bf16.msra.mxu0 0
        %385 = vmatprep.subr.bf16.mxu0 0
        %386 = vmatpush1.bf16.msra.mxu0 0
        %387 = vmatprep.subr.bf16.mxu0 0
        %388 = vmatpush1.bf16.msra.mxu0 0
        %389 = vmatprep.subr.bf16.mxu0 0
        %390 = vmatpush1.bf16.msra.mxu0 0
        %391 = vmatprep.mubr.bf16.mxu0 0
        %392 = vmatmul.mubr.bf16.gmra.mrb[0].mxu0 %v312
        %v393 = vpop.f32.mrb[0].mxu0
        %v394 = vadd.f32 %v302, %v393
        %v395 = vpop.f32.mrb[0].mxu0
        %v396 = vpop.f32.mrb[0].mxu0
        %v397 = vadd.f32 %v302, %v396
        %v398 = vpop.f32.mrb[0].mxu0
        %399 = vmatprep.mubr.bf16.mxu0 0
        %400 = vmatmul.mubr.bf16.gmra.mrb[0].mxu0 %v315
        %v401 = vpop.f32.mrb[0].mxu0
        %v402 = vadd.f32 %v302, %v401
        %v403 = vpop.f32.mrb[0].mxu0
        %v404 = vpop.f32.mrb[0].mxu0
        %v405 = vadd.f32 %v302, %v404
        %v406 = vpop.f32.mrb[0].mxu0
        %407 = vmatprep.mubr.bf16.mxu0 0
        %408 = vmatmul.mubr.bf16.gmra.mrb[0].mxu0 %v318
        %v409 = vpop.f32.mrb[0].mxu0
        %v410 = vadd.f32 %v302, %v409
        %v411 = vpop.f32.mrb[0].mxu0
        %v412 = vpop.f32.mrb[0].mxu0
        %v413 = vadd.f32 %v302, %v412
        %v414 = vpop.f32.mrb[0].mxu0
        %415 = vmatprep.mubr.bf16.mxu0 0
        %416 = vmatmul.mubr.bf16.gmra.mrb[0].mxu0 %v321
        %v417 = vpop.f32.mrb[0].mxu0
        %v418 = vadd.f32 %v302, %v417
        %v419 = vpop.f32.mrb[0].mxu0
        %v420 = vpop.f32.mrb[0].mxu0
        %v421 = vadd.f32 %v302, %v420
        %v422 = vpop.f32.mrb[0].mxu0
        %423 = vmatprep.mubr.bf16.mxu0 0
        %424 = vmatmul.mubr.bf16.gmra.mrb[0].mxu0 %v324
        %v425 = vpop.f32.mrb[0].mxu0
        %v426 = vadd.f32 %v302, %v425
        %v427 = vpop.f32.mrb[0].mxu0
        %v428 = vpop.f32.mrb[0].mxu0
        %v429 = vadd.f32 %v302, %v428
        %v430 = vpop.f32.mrb[0].mxu0
        %431 = vmatprep.mubr.bf16.mxu0 0
        %432 = vmatmul.mubr.bf16.gmra.mrb[0].mxu0 %v327
        %v433 = vpop.f32.mrb[0].mxu0
        %v434 = vadd.f32 %v302, %v433
        %v435 = vpop.f32.mrb[0].mxu0
        %v436 = vpop.f32.mrb[0].mxu0
        %v437 = vadd.f32 %v302, %v436
        %v438 = vpop.f32.mrb[0].mxu0
        %439 = vmatprep.mubr.bf16.mxu0 0
        %440 = vmatmul.mubr.bf16.gmra.mrb[0].mxu0 %v330
        %v441 = vpop.f32.mrb[0].mxu0
        %v442 = vadd.f32 %v302, %v441
        %v443 = vpop.f32.mrb[0].mxu0
        %v444 = vpop.f32.mrb[0].mxu0
        %v445 = vadd.f32 %v302, %v444
        %v446 = vpop.f32.mrb[0].mxu0
        %447 = vmatprep.mubr.bf16.mxu0 0
        %448 = vmatmul.mubr.bf16.gmra.mrb[0].mxu0 %v333
        %v449 = vpop.f32.mrb[0].mxu0
        %v450 = vadd.f32 %v302, %v449
        %v451 = vpop.f32.mrb[0].mxu0
        %v452 = vpop.f32.mrb[0].mxu0
        %v453 = vadd.f32 %v302, %v452
        %v454 = vpop.f32.mrb[0].mxu0
        %455 = vmatprep.mubr.bf16.mxu0 0
        %456 = vmatmul.mubr.bf16.gmra.mrb[0].mxu0 %v336
        %v457 = vpop.f32.mrb[0].mxu0
        %v458 = vadd.f32 %v302, %v457
        %v459 = vpop.f32.mrb[0].mxu0
        %v460 = vpop.f32.mrb[0].mxu0
        %v461 = vadd.f32 %v302, %v460
        %v462 = vpop.f32.mrb[0].mxu0
        %463 = vmatprep.mubr.bf16.mxu0 0
        %464 = vmatmul.mubr.bf16.gmra.mrb[0].mxu0 %v339
        %v465 = vpop.f32.mrb[0].mxu0
        %v466 = vadd.f32 %v302, %v465
        %v467 = vpop.f32.mrb[0].mxu0
        %v468 = vpop.f32.mrb[0].mxu0
        %v469 = vadd.f32 %v302, %v468
        %v470 = vpop.f32.mrb[0].mxu0
        %471 = vmatprep.mubr.bf16.mxu0 0
        %472 = vmatmul.mubr.bf16.gmra.mrb[0].mxu0 %v342
        %v473 = vpop.f32.mrb[0].mxu0
        %v474 = vadd.f32 %v302, %v473
        %v475 = vpop.f32.mrb[0].mxu0
        %v476 = vpop.f32.mrb[0].mxu0
        %v477 = vadd.f32 %v302, %v476
        %v478 = vpop.f32.mrb[0].mxu0
        %479 = vmatprep.mubr.bf16.mxu0 0
        %480 = vmatmul.mubr.bf16.gmra.mrb[0].mxu0 %v345
        %v481 = vpop.f32.mrb[0].mxu0
        %v482 = vadd.f32 %v302, %v481
        %v483 = vpop.f32.mrb[0].mxu0
        %v484 = vpop.f32.mrb[0].mxu0
        %v485 = vadd.f32 %v302, %v484
        %v486 = vpop.f32.mrb[0].mxu0
        %487 = vmatprep.mubr.bf16.mxu0 0
        %488 = vmatmul.mubr.bf16.gmra.mrb[0].mxu0 %v348
        %v489 = vpop.f32.mrb[0].mxu0
        %v490 = vadd.f32 %v302, %v489
        %v491 = vpop.f32.mrb[0].mxu0
        %v492 = vpop.f32.mrb[0].mxu0
        %v493 = vadd.f32 %v302, %v492
        %v494 = vpop.f32.mrb[0].mxu0
        %495 = vmatprep.mubr.bf16.mxu0 0
        %496 = vmatmul.mubr.bf16.gmra.mrb[0].mxu0 %v351
        %v497 = vpop.f32.mrb[0].mxu0
        %v498 = vadd.f32 %v302, %v497
        %v499 = vpop.f32.mrb[0].mxu0
        %v500 = vpop.f32.mrb[0].mxu0
        %v501 = vadd.f32 %v302, %v500
        %v502 = vpop.f32.mrb[0].mxu0
        %503 = vmatprep.mubr.bf16.mxu0 0
        %504 = vmatmul.mubr.bf16.gmra.mrb[0].mxu0 %v354
        %v505 = vpop.f32.mrb[0].mxu0
        %v506 = vadd.f32 %v302, %v505
        %v507 = vpop.f32.mrb[0].mxu0
        %v508 = vpop.f32.mrb[0].mxu0
        %v509 = vadd.f32 %v302, %v508
        %v510 = vpop.f32.mrb[0].mxu0
        %511 = vmatprep.mubr.bf16.mxu0 0
        %512 = vmatmul.mubr.bf16.gmra.mrb[0].mxu0 %v357
        %v513 = vpop.f32.mrb[0].mxu0
        %v514 = vadd.f32 %v302, %v513
        %v515 = vpop.f32.mrb[0].mxu0
        %v516 = vpop.f32.mrb[0].mxu0
        %v517 = vadd.f32 %v302, %v516
        %v518 = vpop.f32.mrb[0].mxu0
        %519 = vdwg.mxu0
        %v520 = vmul.f32 %v394, 0.01
        %v521 = vmul.f32 %v397, 0.01
        %v522 = vmul.f32 %v402, 0.01
        %v523 = vmul.f32 %v405, 0.01
        %v524 = vmul.f32 %v410, 0.01
        %v525 = vmul.f32 %v413, 0.01
        %v526 = vmul.f32 %v418, 0.01
        %v527 = vmul.f32 %v421, 0.01
        %v528 = vmul.f32 %v426, 0.01
        %v529 = vmul.f32 %v429, 0.01
        %v530 = vmul.f32 %v434, 0.01
        %v531 = vmul.f32 %v437, 0.01
        %v532 = vmul.f32 %v442, 0.01
        %v533 = vmul.f32 %v445, 0.01
        %v534 = vmul.f32 %v450, 0.01
        %v535 = vmul.f32 %v453, 0.01
        %v536 = vmul.f32 %v458, 0.01
        %v537 = vmul.f32 %v461, 0.01
        %v538 = vmul.f32 %v466, 0.01
        %v539 = vmul.f32 %v469, 0.01
        %v540 = vmul.f32 %v474, 0.01
        %v541 = vmul.f32 %v477, 0.01
        %v542 = vmul.f32 %v482, 0.01
        %v543 = vmul.f32 %v485, 0.01
        %v544 = vmul.f32 %v490, 0.01
        %v545 = vmul.f32 %v493, 0.01
        %v546 = vmul.f32 %v498, 0.01
        %v547 = vmul.f32 %v501, 0.01
        %v548 = vmul.f32 %v506, 0.01
        %v549 = vmul.f32 %v509, 0.01
        %v550 = vmul.f32 %v514, 0.01
        %v551 = vmul.f32 %v517, 0.01
        %v552 = vmax.f32 %v394, %v520
        %v553 = vmax.f32 %v397, %v521
        %v554 = vmax.f32 %v402, %v522
        %v555 = vmax.f32 %v405, %v523
        %v556 = vmax.f32 %v410, %v524
        %v557 = vmax.f32 %v413, %v525
        %v558 = vmax.f32 %v418, %v526
        %v559 = vmax.f32 %v421, %v527
        %v560 = vmax.f32 %v426, %v528
        %v561 = vmax.f32 %v429, %v529
        %v562 = vmax.f32 %v434, %v530
        %v563 = vmax.f32 %v437, %v531
        %v564 = vmax.f32 %v442, %v532
        %v565 = vmax.f32 %v445, %v533
        %v566 = vmax.f32 %v450, %v534
        %v567 = vmax.f32 %v453, %v535
        %v568 = vmax.f32 %v458, %v536
        %v569 = vmax.f32 %v461, %v537
        %v570 = vmax.f32 %v466, %v538
        %v571 = vmax.f32 %v469, %v539
        %v572 = vmax.f32 %v474, %v540
        %v573 = vmax.f32 %v477, %v541
        %v574 = vmax.f32 %v482, %v542
        %v575 = vmax.f32 %v485, %v543
        %v576 = vmax.f32 %v490, %v544
        %v577 = vmax.f32 %v493, %v545
        %v578 = vmax.f32 %v498, %v546
        %v579 = vmax.f32 %v501, %v547
        %v580 = vmax.f32 %v506, %v548
        %v581 = vmax.f32 %v509, %v549
        %v582 = vmax.f32 %v514, %v550
        %v583 = vmax.f32 %v517, %v551
        %v584 = vpack.c.bf16 %v553, %v552
        %v585 = vpack.c.bf16 %v555, %v554
        %v586 = vpack.c.bf16 %v557, %v556
        %v587 = vpack.c.bf16 %v559, %v558
        %v588 = vpack.c.bf16 %v561, %v560
        %v589 = vpack.c.bf16 %v563, %v562
        %v590 = vpack.c.bf16 %v565, %v564
        %v591 = vpack.c.bf16 %v567, %v566
        %v592 = vpack.c.bf16 %v569, %v568
        %v593 = vpack.c.bf16 %v571, %v570
        %v594 = vpack.c.bf16 %v573, %v572
        %v595 = vpack.c.bf16 %v575, %v574
        %v596 = vpack.c.bf16 %v577, %v576
        %v597 = vpack.c.bf16 %v579, %v578
        %v598 = vpack.c.bf16 %v581, %v580
        %v599 = vpack.c.bf16 %v583, %v582
        %v600 = vld [vmem:[%s3] sm:$0xf]
        %v601 = vld [vmem:[%s3 + $0x4] sm:$0xf]
        %v602 = vld [vmem:[%s3 + $0x8] sm:$0xf]
        %v603 = vld [vmem:[%s3 + $0xc] sm:$0xf]
        %v604 = vld [vmem:[%s3 + $0x10] sm:$0xf]
        %v605 = vld [vmem:[%s3 + $0x14] sm:$0xf]
        %v606 = vld [vmem:[%s3 + $0x18] sm:$0xf]
        %v607 = vld [vmem:[%s3 + $0x1c] sm:$0xf]
        %v608 = vld [vmem:[%s3 + $0x20] sm:$0xf]
        %v609 = vld [vmem:[%s3 + $0x24] sm:$0xf]
        %v610 = vld [vmem:[%s3 + $0x28] sm:$0xf]
        %v611 = vld [vmem:[%s3 + $0x2c] sm:$0xf]
        %v612 = vld [vmem:[%s3 + $0x30] sm:$0xf]
        %v613 = vld [vmem:[%s3 + $0x34] sm:$0xf]
        %v614 = vld [vmem:[%s3 + $0x38] sm:$0xf]
        %v615 = vld [vmem:[%s3 + $0x3c] sm:$0xf]
        %v616 = vld [vmem:[%s4] sm:$0x1]
        %v618 = vlaneseq
        %v619 = vshrl.u32 %v618, 7
        %v620 = vsub.s32 0, %v619
        %v621 = vrot.slane %v616, %v620
        %v639 = vunpack.c.l.b16 %v600
        %v640 = vunpack.c.l.b16 %v601
        %v641 = vunpack.c.l.b16 %v602
        %v642 = vunpack.c.l.b16 %v603
        %v643 = vunpack.c.l.b16 %v604
        %v644 = vunpack.c.l.b16 %v605
        %v645 = vunpack.c.l.b16 %v606
        %v646 = vunpack.c.l.b16 %v607
        %v647 = vunpack.c.l.b16 %v608
        %v648 = vunpack.c.l.b16 %v609
        %v649 = vunpack.c.l.b16 %v610
        %v650 = vunpack.c.l.b16 %v611
        %v651 = vunpack.c.l.b16 %v612
        %v652 = vunpack.c.l.b16 %v613
        %v653 = vunpack.c.l.b16 %v614
        %v654 = vunpack.c.l.b16 %v615
        %v655 = vpack.c.b16 %v640, %v639
        %v656 = vpack.c.b16 %v642, %v641
        %v657 = vpack.c.b16 %v644, %v643
        %v658 = vpack.c.b16 %v646, %v645
        %v659 = vpack.c.b16 %v648, %v647
        %v660 = vpack.c.b16 %v650, %v649
        %v661 = vpack.c.b16 %v652, %v651
        %v662 = vpack.c.b16 %v654, %v653
        %671 = vmatprep.subr.bf16.mxu0 0
        %672 = vmatpush1.bf16.msra.mxu0 %v655
        %673 = vmatprep.subr.bf16.mxu0 0
        %674 = vmatpush1.bf16.msra.mxu0 %v656
        %675 = vmatprep.subr.bf16.mxu0 0
        %676 = vmatpush1.bf16.msra.mxu0 %v657
        %677 = vmatprep.subr.bf16.mxu0 0
        %678 = vmatpush1.bf16.msra.mxu0 %v658
        %679 = vmatprep.subr.bf16.mxu0 0
        %680 = vmatpush1.bf16.msra.mxu0 %v659
        %681 = vmatprep.subr.bf16.mxu0 0
        %682 = vmatpush1.bf16.msra.mxu0 %v660
        %683 = vmatprep.subr.bf16.mxu0 0
        %684 = vmatpush1.bf16.msra.mxu0 %v661
        %685 = vmatprep.subr.bf16.mxu0 0
        %686 = vmatpush1.bf16.msra.mxu0 %v662
        %687 = vmatprep.subr.bf16.mxu0 0
        %688 = vmatpush1.bf16.msra.mxu0 0
        %689 = vmatprep.subr.bf16.mxu0 0
        %690 = vmatpush1.bf16.msra.mxu0 0
        %691 = vmatprep.subr.bf16.mxu0 0
        %692 = vmatpush1.bf16.msra.mxu0 0
        %693 = vmatprep.subr.bf16.mxu0 0
        %694 = vmatpush1.bf16.msra.mxu0 0
        %695 = vmatprep.subr.bf16.mxu0 0
        %696 = vmatpush1.bf16.msra.mxu0 0
        %697 = vmatprep.subr.bf16.mxu0 0
        %698 = vmatpush1.bf16.msra.mxu0 0
        %699 = vmatprep.subr.bf16.mxu0 0
        %700 = vmatpush1.bf16.msra.mxu0 0
        %701 = vmatprep.subr.bf16.mxu0 0
        %702 = vmatpush1.bf16.msra.mxu0 0
        %703 = vmatprep.mubr.bf16.mxu0 0
        %704 = vmatmul.mubr.bf16.gmra.mrb[0].mxu0 %v584
        %v705 = vpop.f32.mrb[0].mxu0
        %v706 = vadd.f32 %v621, %v705
        %v707 = vpop.f32.mrb[0].mxu0
        %v708 = vpop.f32.mrb[0].mxu0
        %v709 = vadd.f32 %v621, %v708
        %v710 = vpop.f32.mrb[0].mxu0
        %711 = vmatprep.mubr.bf16.mxu0 0
        %712 = vmatmul.mubr.bf16.gmra.mrb[0].mxu0 %v585
        %v713 = vpop.f32.mrb[0].mxu0
        %v714 = vadd.f32 %v621, %v713
        %v715 = vpop.f32.mrb[0].mxu0
        %v716 = vpop.f32.mrb[0].mxu0
        %v717 = vadd.f32 %v621, %v716
        %v718 = vpop.f32.mrb[0].mxu0
        %719 = vmatprep.mubr.bf16.mxu0 0
        %720 = vmatmul.mubr.bf16.gmra.mrb[0].mxu0 %v586
        %v721 = vpop.f32.mrb[0].mxu0
        %v722 = vadd.f32 %v621, %v721
        %v723 = vpop.f32.mrb[0].mxu0
        %v724 = vpop.f32.mrb[0].mxu0
        %v725 = vadd.f32 %v621, %v724
        %v726 = vpop.f32.mrb[0].mxu0
        %727 = vmatprep.mubr.bf16.mxu0 0
        %728 = vmatmul.mubr.bf16.gmra.mrb[0].mxu0 %v587
        %v729 = vpop.f32.mrb[0].mxu0
        %v730 = vadd.f32 %v621, %v729
        %v731 = vpop.f32.mrb[0].mxu0
        %v732 = vpop.f32.mrb[0].mxu0
        %v733 = vadd.f32 %v621, %v732
        %v734 = vpop.f32.mrb[0].mxu0
        %735 = vmatprep.mubr.bf16.mxu0 0
        %736 = vmatmul.mubr.bf16.gmra.mrb[0].mxu0 %v588
        %v737 = vpop.f32.mrb[0].mxu0
        %v738 = vadd.f32 %v621, %v737
        %v739 = vpop.f32.mrb[0].mxu0
        %v740 = vpop.f32.mrb[0].mxu0
        %v741 = vadd.f32 %v621, %v740
        %v742 = vpop.f32.mrb[0].mxu0
        %743 = vmatprep.mubr.bf16.mxu0 0
        %744 = vmatmul.mubr.bf16.gmra.mrb[0].mxu0 %v589
        %v745 = vpop.f32.mrb[0].mxu0
        %v746 = vadd.f32 %v621, %v745
        %v747 = vpop.f32.mrb[0].mxu0
        %v748 = vpop.f32.mrb[0].mxu0
        %v749 = vadd.f32 %v621, %v748
        %v750 = vpop.f32.mrb[0].mxu0
        %751 = vmatprep.mubr.bf16.mxu0 0
        %752 = vmatmul.mubr.bf16.gmra.mrb[0].mxu0 %v590
        %v753 = vpop.f32.mrb[0].mxu0
        %v754 = vadd.f32 %v621, %v753
        %v755 = vpop.f32.mrb[0].mxu0
        %v756 = vpop.f32.mrb[0].mxu0
        %v757 = vadd.f32 %v621, %v756
        %v758 = vpop.f32.mrb[0].mxu0
        %759 = vmatprep.mubr.bf16.mxu0 0
        %760 = vmatmul.mubr.bf16.gmra.mrb[0].mxu0 %v591
        %v761 = vpop.f32.mrb[0].mxu0
        %v762 = vadd.f32 %v621, %v761
        %v763 = vpop.f32.mrb[0].mxu0
        %v764 = vpop.f32.mrb[0].mxu0
        %v765 = vadd.f32 %v621, %v764
        %v766 = vpop.f32.mrb[0].mxu0
        %767 = vmatprep.mubr.bf16.mxu0 0
        %768 = vmatmul.mubr.bf16.gmra.mrb[0].mxu0 %v592
        %v769 = vpop.f32.mrb[0].mxu0
        %v770 = vadd.f32 %v621, %v769
        %v771 = vpop.f32.mrb[0].mxu0
        %v772 = vpop.f32.mrb[0].mxu0
        %v773 = vadd.f32 %v621, %v772
        %v774 = vpop.f32.mrb[0].mxu0
        %775 = vmatprep.mubr.bf16.mxu0 0
        %776 = vmatmul.mubr.bf16.gmra.mrb[0].mxu0 %v593
        %v777 = vpop.f32.mrb[0].mxu0
        %v778 = vadd.f32 %v621, %v777
        %v779 = vpop.f32.mrb[0].mxu0
        %v780 = vpop.f32.mrb[0].mxu0
        %v781 = vadd.f32 %v621, %v780
        %v782 = vpop.f32.mrb[0].mxu0
        %783 = vmatprep.mubr.bf16.mxu0 0
        %784 = vmatmul.mubr.bf16.gmra.mrb[0].mxu0 %v594
        %v785 = vpop.f32.mrb[0].mxu0
        %v786 = vadd.f32 %v621, %v785
        %v787 = vpop.f32.mrb[0].mxu0
        %v788 = vpop.f32.mrb[0].mxu0
        %v789 = vadd.f32 %v621, %v788
        %v790 = vpop.f32.mrb[0].mxu0
        %791 = vmatprep.mubr.bf16.mxu0 0
        %792 = vmatmul.mubr.bf16.gmra.mrb[0].mxu0 %v595
        %v793 = vpop.f32.mrb[0].mxu0
        %v794 = vadd.f32 %v621, %v793
        %v795 = vpop.f32.mrb[0].mxu0
        %v796 = vpop.f32.mrb[0].mxu0
        %v797 = vadd.f32 %v621, %v796
        %v798 = vpop.f32.mrb[0].mxu0
        %799 = vmatprep.mubr.bf16.mxu0 0
        %800 = vmatmul.mubr.bf16.gmra.mrb[0].mxu0 %v596
        %v801 = vpop.f32.mrb[0].mxu0
        %v802 = vadd.f32 %v621, %v801
        %v803 = vpop.f32.mrb[0].mxu0
        %v804 = vpop.f32.mrb[0].mxu0
        %v805 = vadd.f32 %v621, %v804
        %v806 = vpop.f32.mrb[0].mxu0
        %807 = vmatprep.mubr.bf16.mxu0 0
        %808 = vmatmul.mubr.bf16.gmra.mrb[0].mxu0 %v597
        %v809 = vpop.f32.mrb[0].mxu0
        %v810 = vadd.f32 %v621, %v809
        %v811 = vpop.f32.mrb[0].mxu0
        %v812 = vpop.f32.mrb[0].mxu0
        %v813 = vadd.f32 %v621, %v812
        %v814 = vpop.f32.mrb[0].mxu0
        %815 = vmatprep.mubr.bf16.mxu0 0
        %816 = vmatmul.mubr.bf16.gmra.mrb[0].mxu0 %v598
        %v817 = vpop.f32.mrb[0].mxu0
        %v818 = vadd.f32 %v621, %v817
        %v819 = vpop.f32.mrb[0].mxu0
        %v820 = vpop.f32.mrb[0].mxu0
        %v821 = vadd.f32 %v621, %v820
        %v822 = vpop.f32.mrb[0].mxu0
        %823 = vmatprep.mubr.bf16.mxu0 0
        %824 = vmatmul.mubr.bf16.gmra.mrb[0].mxu0 %v599
        %v825 = vpop.f32.mrb[0].mxu0
        %v826 = vadd.f32 %v621, %v825
        %v827 = vpop.f32.mrb[0].mxu0
        %v828 = vpop.f32.mrb[0].mxu0
        %v829 = vadd.f32 %v621, %v828
        %v830 = vpop.f32.mrb[0].mxu0
        %831 = vdwg.mxu0
        %vm832 = vcmask 261120
        %833 = vst.msk [vmem:[%s226] sm:$0xff] %vm832, %v706
        %834 = vst.msk [vmem:[%s226 + $0x8] sm:$0xff] %vm832, %v709
        %835 = vst.msk [vmem:[%s226 + $0x10] sm:$0xff] %vm832, %v714
        %836 = vst.msk [vmem:[%s226 + $0x18] sm:$0xff] %vm832, %v717
        %837 = vst.msk [vmem:[%s226 + $0x20] sm:$0xff] %vm832, %v722
        %838 = vst.msk [vmem:[%s226 + $0x28] sm:$0xff] %vm832, %v725
        %839 = vst.msk [vmem:[%s226 + $0x30] sm:$0xff] %vm832, %v730
        %840 = vst.msk [vmem:[%s226 + $0x38] sm:$0xff] %vm832, %v733
        %841 = vst.msk [vmem:[%s226 + $0x40] sm:$0xff] %vm832, %v738
        %842 = vst.msk [vmem:[%s226 + $0x48] sm:$0xff] %vm832, %v741
        %843 = vst.msk [vmem:[%s226 + $0x50] sm:$0xff] %vm832, %v746
        %844 = vst.msk [vmem:[%s226 + $0x58] sm:$0xff] %vm832, %v749
        %845 = vst.msk [vmem:[%s226 + $0x60] sm:$0xff] %vm832, %v754
        %846 = vst.msk [vmem:[%s226 + $0x68] sm:$0xff] %vm832, %v757
        %847 = vst.msk [vmem:[%s226 + $0x70] sm:$0xff] %vm832, %v762
        %848 = vst.msk [vmem:[%s226 + $0x78] sm:$0xff] %vm832, %v765
        %849 = vst.msk [vmem:[%s226 + $0x80] sm:$0xff] %vm832, %v770
        %850 = vst.msk [vmem:[%s226 + $0x88] sm:$0xff] %vm832, %v773
        %851 = vst.msk [vmem:[%s226 + $0x90] sm:$0xff] %vm832, %v778
        %852 = vst.msk [vmem:[%s226 + $0x98] sm:$0xff] %vm832, %v781
        %853 = vst.msk [vmem:[%s226 + $0xa0] sm:$0xff] %vm832, %v786
        %854 = vst.msk [vmem:[%s226 + $0xa8] sm:$0xff] %vm832, %v789
        %855 = vst.msk [vmem:[%s226 + $0xb0] sm:$0xff] %vm832, %v794
        %856 = vst.msk [vmem:[%s226 + $0xb8] sm:$0xff] %vm832, %v797
        %857 = vst.msk [vmem:[%s226 + $0xc0] sm:$0xff] %vm832, %v802
        %858 = vst.msk [vmem:[%s226 + $0xc8] sm:$0xff] %vm832, %v805
        %859 = vst.msk [vmem:[%s226 + $0xd0] sm:$0xff] %vm832, %v810
        %860 = vst.msk [vmem:[%s226 + $0xd8] sm:$0xff] %vm832, %v813
        %861 = vst.msk [vmem:[%s226 + $0xe0] sm:$0xff] %vm832, %v818
        %862 = vst.msk [vmem:[%s226 + $0xe8] sm:$0xff] %vm832, %v821
        %863 = vst.msk [vmem:[%s226 + $0xf0] sm:$0xff] %vm832, %v826
        %864 = vst.msk [vmem:[%s226 + $0xf8] sm:$0xff] %vm832, %v829
        %s865 = sand.u32 %s134, 1
        %s866 = sand.u32 %s134, 1
        %s867 = smul.addr %s866, 256
        %s868 = scalar_lea.vmem [#allocation2], %s867
        // Predicated region
        $region41: #{tpu_custom_call.1} parent=39 // pred_check
          %p869 = pneg %p144
        $region42: #{tpu_custom_call.1} parent=39 // pred_check_branch
          %871 = sbr.rel (%p869) target = $region44
        $region43: #{tpu_custom_call.1} parent=39 // pred_region
          %s872 = smul.u32 32, %s16
          %s873 = ssub.s32 125, %s872
          %p874 = scmp.lt.s32.totalorder %s873, 32
          %s875 = scalar_select %p874, %s873, 32
          %s876 = smul.u32 128, %s875
          %p877 = scmp.ne.s32.totalorder 0, %s876
          %s878 = smul.addr %s872, 8
          %s879 = scalar_lea.vmem %s5, %s878
          // Predicated region
          $region45: #{tpu_custom_call.1} parent=43 // pred_check
            %p880 = pneg %p877
          $region46: #{tpu_custom_call.1} parent=43 // pred_check_branch
            %882 = sbr.rel (%p880) target = $region48
          $region47: #{tpu_custom_call.1} parent=43 // pred_region
            // Predicated region
            $region49: #{tpu_custom_call.1} parent=47 // pred_check
              _
            $region50: #{tpu_custom_call.1} parent=47 // pred_check_branch
              %884 = sbr.rel (0) target = $region52
            $region51: #{tpu_custom_call.1} parent=47 // pred_region
              // Predicated region
              $region71: #{tpu_custom_call.1} parent=51 // pred_check
                _
              $region72: #{tpu_custom_call.1} parent=51 // pred_check_branch
                %995 = sbr.rel (0) target = $region74
              $region73: #{tpu_custom_call.1} parent=51 // pred_region
                %s996 = sshrl.u32 %s875, 5
                // While loop
                $region75: #{tpu_custom_call.1} parent=73 // loop_pre_header
                  _
                $region76: #{tpu_custom_call.1} parent=73 // loop_header
                  %s998 = sphi 0, %s1000
                  %p999 = scmp.ge.s32.totalorder %s998, %s996
                  %s1003 = sphi 0, %s1072
                  %s1004 = sphi %s868, %s1075
                  %s1005 = sphi %s879, %s1076
                $region77: #{tpu_custom_call.1} parent=73 // loop_header_branch
                  %1002 = sbr.rel (%p999) target = $region81
                $region78: #{tpu_custom_call.1} parent=73 // loop_body
                  %v1006 = vld [vmem:[%s1004] sm:$0xff]
                  %1007 = vst [vmem:[%s1005] sm:$0xff] %v1006
                  %v1008 = vld [vmem:[%s1004 + $0x8] sm:$0xff]
                  %1009 = vst [vmem:[%s1005 + $0x8] sm:$0xff] %v1008
                  %v1010 = vld [vmem:[%s1004 + $0x10] sm:$0xff]
                  %1011 = vst [vmem:[%s1005 + $0x10] sm:$0xff] %v1010
                  %v1012 = vld [vmem:[%s1004 + $0x18] sm:$0xff]
                  %1013 = vst [vmem:[%s1005 + $0x18] sm:$0xff] %v1012
                  %v1014 = vld [vmem:[%s1004 + $0x20] sm:$0xff]
                  %1015 = vst [vmem:[%s1005 + $0x20] sm:$0xff] %v1014
                  %v1016 = vld [vmem:[%s1004 + $0x28] sm:$0xff]
                  %1017 = vst [vmem:[%s1005 + $0x28] sm:$0xff] %v1016
                  %v1018 = vld [vmem:[%s1004 + $0x30] sm:$0xff]
                  %1019 = vst [vmem:[%s1005 + $0x30] sm:$0xff] %v1018
                  %v1020 = vld [vmem:[%s1004 + $0x38] sm:$0xff]
                  %1021 = vst [vmem:[%s1005 + $0x38] sm:$0xff] %v1020
                  %v1022 = vld [vmem:[%s1004 + $0x40] sm:$0xff]
                  %1023 = vst [vmem:[%s1005 + $0x40] sm:$0xff] %v1022
                  %v1024 = vld [vmem:[%s1004 + $0x48] sm:$0xff]
                  %1025 = vst [vmem:[%s1005 + $0x48] sm:$0xff] %v1024
                  %v1026 = vld [vmem:[%s1004 + $0x50] sm:$0xff]
                  %1027 = vst [vmem:[%s1005 + $0x50] sm:$0xff] %v1026
                  %v1028 = vld [vmem:[%s1004 + $0x58] sm:$0xff]
                  %1029 = vst [vmem:[%s1005 + $0x58] sm:$0xff] %v1028
                  %v1030 = vld [vmem:[%s1004 + $0x60] sm:$0xff]
                  %1031 = vst [vmem:[%s1005 + $0x60] sm:$0xff] %v1030
                  %v1032 = vld [vmem:[%s1004 + $0x68] sm:$0xff]
                  %1033 = vst [vmem:[%s1005 + $0x68] sm:$0xff] %v1032
                  %v1034 = vld [vmem:[%s1004 + $0x70] sm:$0xff]
                  %1035 = vst [vmem:[%s1005 + $0x70] sm:$0xff] %v1034
                  %v1036 = vld [vmem:[%s1004 + $0x78] sm:$0xff]
                  %1037 = vst [vmem:[%s1005 + $0x78] sm:$0xff] %v1036
                  %v1038 = vld [vmem:[%s1004 + $0x80] sm:$0xff]
                  %1039 = vst [vmem:[%s1005 + $0x80] sm:$0xff] %v1038
                  %v1040 = vld [vmem:[%s1004 + $0x88] sm:$0xff]
                  %1041 = vst [vmem:[%s1005 + $0x88] sm:$0xff] %v1040
                  %v1042 = vld [vmem:[%s1004 + $0x90] sm:$0xff]
                  %1043 = vst [vmem:[%s1005 + $0x90] sm:$0xff] %v1042
                  %v1044 = vld [vmem:[%s1004 + $0x98] sm:$0xff]
                  %1045 = vst [vmem:[%s1005 + $0x98] sm:$0xff] %v1044
                  %v1046 = vld [vmem:[%s1004 + $0xa0] sm:$0xff]
                  %1047 = vst [vmem:[%s1005 + $0xa0] sm:$0xff] %v1046
                  %v1048 = vld [vmem:[%s1004 + $0xa8] sm:$0xff]
                  %1049 = vst [vmem:[%s1005 + $0xa8] sm:$0xff] %v1048
                  %v1050 = vld [vmem:[%s1004 + $0xb0] sm:$0xff]
                  %1051 = vst [vmem:[%s1005 + $0xb0] sm:$0xff] %v1050
                  %v1052 = vld [vmem:[%s1004 + $0xb8] sm:$0xff]
                  %1053 = vst [vmem:[%s1005 + $0xb8] sm:$0xff] %v1052
                  %v1054 = vld [vmem:[%s1004 + $0xc0] sm:$0xff]
                  %1055 = vst [vmem:[%s1005 + $0xc0] sm:$0xff] %v1054
                  %v1056 = vld [vmem:[%s1004 + $0xc8] sm:$0xff]
                  %1057 = vst [vmem:[%s1005 + $0xc8] sm:$0xff] %v1056
                  %v1058 = vld [vmem:[%s1004 + $0xd0] sm:$0xff]
                  %1059 = vst [vmem:[%s1005 + $0xd0] sm:$0xff] %v1058
                  %v1060 = vld [vmem:[%s1004 + $0xd8] sm:$0xff]
                  %1061 = vst [vmem:[%s1005 + $0xd8] sm:$0xff] %v1060
                  %v1062 = vld [vmem:[%s1004 + $0xe0] sm:$0xff]
                  %1063 = vst [vmem:[%s1005 + $0xe0] sm:$0xff] %v1062
                  %v1064 = vld [vmem:[%s1004 + $0xe8] sm:$0xff]
                  %1065 = vst [vmem:[%s1005 + $0xe8] sm:$0xff] %v1064
                  %v1066 = vld [vmem:[%s1004 + $0xf0] sm:$0xff]
                  %1067 = vst [vmem:[%s1005 + $0xf0] sm:$0xff] %v1066
                  %v1068 = vld [vmem:[%s1004 + $0xf8] sm:$0xff]
                  %1069 = vst [vmem:[%s1005 + $0xf8] sm:$0xff] %v1068
                  %s1070 = sadd.s32 1, %s1003
                  %p1071 = scmp.ge.s32.totalorder %s1070, %s996
                  %s1072 = scalar_select %p1071, 0, %s1070
                  %s1073 = smul.u32 %s1072, 256
                  %s1074 = smul.u32 %s1072, 256
                  %s1075 = scalar_lea.vmem %s868, %s1073 [#allocation2]
                  %s1076 = scalar_lea.vmem %s879, %s1074
                $region79: #{tpu_custom_call.1} parent=73 // loop_footer
                  %s1000 = sadd.s32 %s998, 1
                $region80: #{tpu_custom_call.1} parent=73 // loop_footer_branch
                  %997 = sbr.rel target = $region76
                $region81: #{tpu_custom_call.1} parent=73 // loop_exit
                  _
                %s1077 = sshrl.u32 %s875, 5
                %s1078 = sand.u32 %s875, 31
                %s1079 = smul.u32 %s1077, 32
                %s1080 = smul.u32 8, %s1079
                %s1081 = scalar_lea.vmem %s868, %s1080 [#allocation2]
                %s1082 = smul.u32 8, %s1079
                %s1083 = scalar_lea.vmem %s879, %s1082
                // While loop
                $region82: #{tpu_custom_call.1} parent=73 // loop_pre_header
                  _
                $region83: #{tpu_custom_call.1} parent=73 // loop_header
                  %s1085 = sphi 0, %s1087
                  %p1086 = scmp.ge.s32.totalorder %s1085, %s1078
                  %s1090 = sphi 0, %s1097
                  %s1091 = sphi %s1081, %s1100
                  %s1092 = sphi %s1083, %s1101
                $region84: #{tpu_custom_call.1} parent=73 // loop_header_branch
                  %1089 = sbr.rel (%p1086) target = $region88
                $region85: #{tpu_custom_call.1} parent=73 // loop_body
                  %v1093 = vld [vmem:[%s1091] sm:$0xff]
                  %1094 = vst [vmem:[%s1092] sm:$0xff] %v1093
                  %s1095 = sadd.s32 1, %s1090
                  %p1096 = scmp.ge.s32.totalorder %s1095, %s1078
                  %s1097 = scalar_select %p1096, 0, %s1095
                  %s1098 = smul.u32 %s1097, 8
                  %s1099 = smul.u32 %s1097, 8
                  %s1100 = scalar_lea.vmem %s1081, %s1098 [#allocation2]
                  %s1101 = scalar_lea.vmem %s1083, %s1099
                $region86: #{tpu_custom_call.1} parent=73 // loop_footer
                  %s1087 = sadd.s32 %s1085, 1
                $region87: #{tpu_custom_call.1} parent=73 // loop_footer_branch
                  %1084 = sbr.rel target = $region83
                $region88: #{tpu_custom_call.1} parent=73 // loop_exit
                  _
              $region74: #{tpu_custom_call.1} parent=51 // pred_fallthru
                _
              // Predicated region
              $region89: #{tpu_custom_call.1} parent=51 // pred_check
                _
              $region90: #{tpu_custom_call.1} parent=51 // pred_check_branch
                %1103 = sbr.rel target = $region92
              $region91: #{tpu_custom_call.1} parent=51 // pred_region
                _
              $region92: #{tpu_custom_call.1} parent=51 // pred_fallthru
                _
            $region52: #{tpu_custom_call.1} parent=47 // pred_fallthru
              _
            // Predicated region
            $region53: #{tpu_custom_call.1} parent=47 // pred_check
              _
            $region54: #{tpu_custom_call.1} parent=47 // pred_check_branch
              %886 = sbr.rel target = $region56
            $region55: #{tpu_custom_call.1} parent=47 // pred_region
              %s888 = sshrl.u32 %s875, 5
              // While loop
              $region57: #{tpu_custom_call.1} parent=55 // loop_pre_header
                _
              $region58: #{tpu_custom_call.1} parent=55 // loop_header
                %s890 = sphi 0, %s892
                %p891 = scmp.ge.s32.totalorder %s890, %s888
                %s895 = sphi 0, %s964
                %s896 = sphi %s868, %s967
                %s897 = sphi %s879, %s968
              $region59: #{tpu_custom_call.1} parent=55 // loop_header_branch
                %894 = sbr.rel (%p891) target = $region63
              $region60: #{tpu_custom_call.1} parent=55 // loop_body
                %v898 = vld [vmem:[%s896] sm:$0xff]
                %899 = vst [vmem:[%s897] sm:$0xff] %v898
                %v900 = vld [vmem:[%s896 + $0x8] sm:$0xff]
                %901 = vst [vmem:[%s897 + $0x8] sm:$0xff] %v900
                %v902 = vld [vmem:[%s896 + $0x10] sm:$0xff]
                %903 = vst [vmem:[%s897 + $0x10] sm:$0xff] %v902
                %v904 = vld [vmem:[%s896 + $0x18] sm:$0xff]
                %905 = vst [vmem:[%s897 + $0x18] sm:$0xff] %v904
                %v906 = vld [vmem:[%s896 + $0x20] sm:$0xff]
                %907 = vst [vmem:[%s897 + $0x20] sm:$0xff] %v906
                %v908 = vld [vmem:[%s896 + $0x28] sm:$0xff]
                %909 = vst [vmem:[%s897 + $0x28] sm:$0xff] %v908
                %v910 = vld [vmem:[%s896 + $0x30] sm:$0xff]
                %911 = vst [vmem:[%s897 + $0x30] sm:$0xff] %v910
                %v912 = vld [vmem:[%s896 + $0x38] sm:$0xff]
                %913 = vst [vmem:[%s897 + $0x38] sm:$0xff] %v912
                %v914 = vld [vmem:[%s896 + $0x40] sm:$0xff]
                %915 = vst [vmem:[%s897 + $0x40] sm:$0xff] %v914
                %v916 = vld [vmem:[%s896 + $0x48] sm:$0xff]
                %917 = vst [vmem:[%s897 + $0x48] sm:$0xff] %v916
                %v918 = vld [vmem:[%s896 + $0x50] sm:$0xff]
                %919 = vst [vmem:[%s897 + $0x50] sm:$0xff] %v918
                %v920 = vld [vmem:[%s896 + $0x58] sm:$0xff]
                %921 = vst [vmem:[%s897 + $0x58] sm:$0xff] %v920
                %v922 = vld [vmem:[%s896 + $0x60] sm:$0xff]
                %923 = vst [vmem:[%s897 + $0x60] sm:$0xff] %v922
                %v924 = vld [vmem:[%s896 + $0x68] sm:$0xff]
                %925 = vst [vmem:[%s897 + $0x68] sm:$0xff] %v924
                %v926 = vld [vmem:[%s896 + $0x70] sm:$0xff]
                %927 = vst [vmem:[%s897 + $0x70] sm:$0xff] %v926
                %v928 = vld [vmem:[%s896 + $0x78] sm:$0xff]
                %929 = vst [vmem:[%s897 + $0x78] sm:$0xff] %v928
                %v930 = vld [vmem:[%s896 + $0x80] sm:$0xff]
                %931 = vst [vmem:[%s897 + $0x80] sm:$0xff] %v930
                %v932 = vld [vmem:[%s896 + $0x88] sm:$0xff]
                %933 = vst [vmem:[%s897 + $0x88] sm:$0xff] %v932
                %v934 = vld [vmem:[%s896 + $0x90] sm:$0xff]
                %935 = vst [vmem:[%s897 + $0x90] sm:$0xff] %v934
                %v936 = vld [vmem:[%s896 + $0x98] sm:$0xff]
                %937 = vst [vmem:[%s897 + $0x98] sm:$0xff] %v936
                %v938 = vld [vmem:[%s896 + $0xa0] sm:$0xff]
                %939 = vst [vmem:[%s897 + $0xa0] sm:$0xff] %v938
                %v940 = vld [vmem:[%s896 + $0xa8] sm:$0xff]
                %941 = vst [vmem:[%s897 + $0xa8] sm:$0xff] %v940
                %v942 = vld [vmem:[%s896 + $0xb0] sm:$0xff]
                %943 = vst [vmem:[%s897 + $0xb0] sm:$0xff] %v942
                %v944 = vld [vmem:[%s896 + $0xb8] sm:$0xff]
                %945 = vst [vmem:[%s897 + $0xb8] sm:$0xff] %v944
                %v946 = vld [vmem:[%s896 + $0xc0] sm:$0xff]
                %947 = vst [vmem:[%s897 + $0xc0] sm:$0xff] %v946
                %v948 = vld [vmem:[%s896 + $0xc8] sm:$0xff]
                %949 = vst [vmem:[%s897 + $0xc8] sm:$0xff] %v948
                %v950 = vld [vmem:[%s896 + $0xd0] sm:$0xff]
                %951 = vst [vmem:[%s897 + $0xd0] sm:$0xff] %v950
                %v952 = vld [vmem:[%s896 + $0xd8] sm:$0xff]
                %953 = vst [vmem:[%s897 + $0xd8] sm:$0xff] %v952
                %v954 = vld [vmem:[%s896 + $0xe0] sm:$0xff]
                %955 = vst [vmem:[%s897 + $0xe0] sm:$0xff] %v954
                %v956 = vld [vmem:[%s896 + $0xe8] sm:$0xff]
                %957 = vst [vmem:[%s897 + $0xe8] sm:$0xff] %v956
                %v958 = vld [vmem:[%s896 + $0xf0] sm:$0xff]
                %959 = vst [vmem:[%s897 + $0xf0] sm:$0xff] %v958
                %v960 = vld [vmem:[%s896 + $0xf8] sm:$0xff]
                %961 = vst [vmem:[%s897 + $0xf8] sm:$0xff] %v960
                %s962 = sadd.s32 1, %s895
                %p963 = scmp.ge.s32.totalorder %s962, %s888
                %s964 = scalar_select %p963, 0, %s962
                %s965 = smul.u32 %s964, 256
                %s966 = smul.u32 %s964, 256
                %s967 = scalar_lea.vmem %s868, %s965 [#allocation2]
                %s968 = scalar_lea.vmem %s879, %s966
              $region61: #{tpu_custom_call.1} parent=55 // loop_footer
                %s892 = sadd.s32 %s890, 1
              $region62: #{tpu_custom_call.1} parent=55 // loop_footer_branch
                %889 = sbr.rel target = $region58
              $region63: #{tpu_custom_call.1} parent=55 // loop_exit
                _
              %s969 = sshrl.u32 %s875, 5
              %s970 = sand.u32 %s875, 31
              %s971 = smul.u32 %s969, 32
              %s972 = smul.u32 8, %s971
              %s973 = scalar_lea.vmem %s868, %s972 [#allocation2]
              %s974 = smul.u32 8, %s971
              %s975 = scalar_lea.vmem %s879, %s974
              // While loop
              $region64: #{tpu_custom_call.1} parent=55 // loop_pre_header
                _
              $region65: #{tpu_custom_call.1} parent=55 // loop_header
                %s977 = sphi 0, %s979
                %p978 = scmp.ge.s32.totalorder %s977, %s970
                %s982 = sphi 0, %s989
                %s983 = sphi %s973, %s992
                %s984 = sphi %s975, %s993
              $region66: #{tpu_custom_call.1} parent=55 // loop_header_branch
                %981 = sbr.rel (%p978) target = $region70
              $region67: #{tpu_custom_call.1} parent=55 // loop_body
                %v985 = vld [vmem:[%s983] sm:$0xff]
                %986 = vst [vmem:[%s984] sm:$0xff] %v985
                %s987 = sadd.s32 1, %s982
                %p988 = scmp.ge.s32.totalorder %s987, %s970
                %s989 = scalar_select %p988, 0, %s987
                %s990 = smul.u32 %s989, 8
                %s991 = smul.u32 %s989, 8
                %s992 = scalar_lea.vmem %s973, %s990 [#allocation2]
                %s993 = scalar_lea.vmem %s975, %s991
              $region68: #{tpu_custom_call.1} parent=55 // loop_footer
                %s979 = sadd.s32 %s977, 1
              $region69: #{tpu_custom_call.1} parent=55 // loop_footer_branch
                %976 = sbr.rel target = $region65
              $region70: #{tpu_custom_call.1} parent=55 // loop_exit
                _
            $region56: #{tpu_custom_call.1} parent=47 // pred_fallthru
              _
          $region48: #{tpu_custom_call.1} parent=43 // pred_fallthru
            _
          %1104 = vnop
        $region44: #{tpu_custom_call.1} parent=39 // pred_fallthru
          _
      $region40: #{tpu_custom_call.1} parent=5 // pred_fallthru
        _
      %p1105 = scmp.le.s32.totalorder 2, %s11
      // Predicated region
      $region93: #{tpu_custom_call.1} parent=5 // pred_check
        %p1106 = pneg %p1105
      $region94: #{tpu_custom_call.1} parent=5 // pred_check_branch
        %1108 = sbr.rel (%p1106) target = $region96
      $region95: #{tpu_custom_call.1} parent=5 // pred_region
        %s1109 = ssub.s32 %s11, 2
        // Predicated region
        $region97: #{tpu_custom_call.1} parent=95 // pred_check
          %p1110 = pneg %p150
        $region98: #{tpu_custom_call.1} parent=95 // pred_check_branch
          %1112 = sbr.rel (%p1110) target = $region100
        $region99: #{tpu_custom_call.1} parent=95 // pred_region
          %s1113 = sand.u32 %s135, 1
          %s1114 = sand.u32 %s135, 1
          %s1115 = smul.addr %s1114, 256
          %s1116 = scalar_lea.vmem [#allocation2], %s1115
        $region100: #{tpu_custom_call.1} parent=95 // pred_fallthru
          _
      $region96: #{tpu_custom_call.1} parent=5 // pred_fallthru
        _
    $region6: #{tpu_custom_call.1} parent=1 // loop_footer
      %s15 = sadd.s32 1, %s11
    $region7: #{tpu_custom_call.1} parent=1 // loop_footer_branch
      %10 = sbr.rel target = $region3
    $region8: #{tpu_custom_call.1} parent=1 // loop_exit
      _

</llo_original>
